<compile_context>
chip_gen: v6e
topology: v6e:2x2x1
jax: 0.10.0
libtpu: 0.0.40
codegen_flags: <defaults>
</compile_context>

<pallas_src>
import functools

import jax
import jax.numpy as jnp
from jax.experimental import pallas as pl
from jax.experimental.pallas import tpu as pltpu


def _round_up(x: int, n: int) -> int:
    return ((x + n - 1) // n) * n


def _sublane_multiple(*dtypes) -> int:
    # Native vreg tile is (8, 128) in 32-bit; sub-32-bit dtypes pack along
    # sublanes, so the row-tile must be a multiple of 8 * (4 / itemsize).
    mult = 8
    for dt in dtypes:
        itemsize = jnp.dtype(dt).itemsize
        mult = max(mult, 8 * max(1, 4 // itemsize))
    return mult


def _vmem_budget_bytes() -> int:
    # Conservative per-chip budget for the double-buffered input/output tiles.
    try:
        kind = jax.devices()[0].device_kind.lower()
    except Exception:  # pragma: no cover - defensive; default is safe anywhere
        kind = ""
    if "v6" in kind or "v7" in kind:
        return 24 << 20  # 32 MiB scoped default on v6e/v7x, leave headroom
    return 12 << 20      # fits v5e's 16 MiB scoped default with headroom


def _aligner_kernel(x_ref, w_ref, o_ref):
    # x_ref: (TM, K) tile, w_ref: (K, N) resident weight, o_ref: (TM, N) tile.
    acc = jnp.dot(x_ref[...], w_ref[...], preferred_element_type=jnp.float32)
    o_ref[...] = jnp.maximum(acc, 0.0).astype(o_ref.dtype)  # fused ReLU + cast


@functools.partial(
    jax.jit, static_argnames=("tile_m", "out_dtype", "min_pallas_rows")
)
def ingestables_simple_numeric_aligner(
    x_keys,
    weight_t,
    *,
    tile_m=None,
    out_dtype=None,
    min_pallas_rows: int = 512,
):
    """relu(x_keys @ weight_t), fused in a single Pallas kernel.

    Args:
      x_keys:          (*, in_features) float array.
      weight_t:        (in_features, out_features) array (transposed vs. torch).
      tile_m:          optional row tile; if None it is derived from a per-chip
                       VMEM budget. Rounded up to the sublane multiple.
      out_dtype:       optional output dtype (e.g. jnp.bfloat16) — the output
                       write dominates HBM traffic here, so a narrow out dtype
                       is the biggest bandwidth lever. Defaults to x_keys.dtype.
      min_pallas_rows: below this flattened row count, fall back to plain XLA
                       (matmul+relu fuse fine and skip custom-call overhead).

    Returns:
      (*, out_features) array in `out_dtype` (default: x_keys.dtype).
    """
    *lead, in_features = x_keys.shape
    out_features = weight_t.shape[1]
    out_dtype = jnp.dtype(out_dtype) if out_dtype is not None else x_keys.dtype

    m = 1
    for d in lead:
        m *= d
    x2d = x_keys.reshape(m, in_features)

    # Tiny-M bypass: fixed per-grid-step + dispatch overhead would dominate.
    if m < min_pallas_rows:
        y = jnp.maximum(
            jnp.dot(x2d, weight_t, preferred_element_type=jnp.float32), 0.0
        ).astype(out_dtype)
        return y.reshape(*lead, out_features)

    x_itemsize = jnp.dtype(x2d.dtype).itemsize
    w_itemsize = jnp.dtype(weight_t.dtype).itemsize
    out_itemsize = jnp.dtype(out_dtype).itemsize
    sublane = _sublane_multiple(x2d.dtype, out_dtype)

    # VMEM footprint per row of a tile: lane-padded x + out, double-buffered.
    k_lanes = _round_up(in_features, 128)
    n_lanes = _round_up(out_features, 128)
    bytes_per_row = 2 * (k_lanes * x_itemsize + n_lanes * out_itemsize)

    if tile_m is None:
        budget = _vmem_budget_bytes()
        tm = max(256, min(16384, budget // bytes_per_row))
        tm = max(256, (tm // 256) * 256)  # multiple of 256: MXU/sublane friendly
    else:
        tm = max(sublane, _round_up(int(tile_m), sublane))

    # Clamp to the (sublane-rounded) problem size so tiny M doesn't over-pad.
    tm = min(tm, _round_up(m, sublane))

    # Guarantee >= 2 grid steps on non-tiny inputs so the "parallel" axis can
    # shard across v7x's two TensorCores (harmless elsewhere).
    if pl.cdiv(m, tm) == 1 and m >= 1024:
        tm = _round_up(pl.cdiv(m, 2), sublane)

    grid = (pl.cdiv(m, tm),)

    # Raise the scoped VMEM limit to cover the double-buffered tiles; cap well
    # under v7x's 64 MiB physical VMEM (v5e/v6e have 128 MiB physical).
    weight_vmem = 2 * in_features * out_features * w_itemsize
    needed_vmem = tm * bytes_per_row + weight_vmem
    vmem_limit = int(min(48 << 20, max(32 << 20, needed_vmem + (4 << 20))))

    cost = pl.CostEstimate(
        flops=2 * m * in_features * out_features,
        transcendentals=0,
        bytes_accessed=(
            m * in_features * x_itemsize
            + in_features * out_features * w_itemsize
            + m * out_features * out_itemsize
        ),
    )

    out2d = pl.pallas_call(
        _aligner_kernel,
        out_shape=jax.ShapeDtypeStruct((m, out_features), out_dtype),
        grid_spec=pltpu.PrefetchScalarGridSpec(
            num_scalar_prefetch=0,
            grid=grid,
            in_specs=[
                pl.BlockSpec((tm, in_features), lambda i: (i, 0)),
                pl.BlockSpec((in_features, out_features), lambda i: (0, 0)),
            ],
            out_specs=pl.BlockSpec((tm, out_features), lambda i: (i, 0)),
        ),
        compiler_params=pltpu.CompilerParams(
            dimension_semantics=("parallel",),  # shard row tiles across TCs
            vmem_limit_bytes=vmem_limit,
        ),
        cost_estimate=cost,
    )(x2d, weight_t)

    return out2d.reshape(*lead, out_features)


if __name__ == "__main__":
    # Shapes consistent with the module's forward:
    #   x_keys: (batch, n_features, in_features) -> (batch, n_features, out_features)
    in_features, out_features = 32, 128

    key = jax.random.PRNGKey(0)
    kx, kw, kx2 = jax.random.split(key, 3)

    # Deterministic nn.Linear-style init (uniform(-1/sqrt(fan_in), ...)),
    # bias=False per the module. Stored transposed: (in_features, out_features).
    bound = 1.0 / (in_features ** 0.5)
    weight_t = jax.random.uniform(
        kw, (in_features, out_features), jnp.float32, minval=-bound, maxval=bound
    )

    def ref_fn(x, w):
        return jnp.maximum(jnp.einsum("...k,ko->...o", x, w), 0.0)

    # 1) Small shape, force the Pallas path (exact PyTorch-module semantics).
    x_small = jax.random.normal(kx, (2, 8, in_features), jnp.float32)
    out = ingestables_simple_numeric_aligner(x_small, weight_t, min_pallas_rows=0)
    out = jax.block_until_ready(out)
    ref_small = ref_fn(x_small, weight_t)
    assert out.shape == (2, 8, out_features), out.shape
    assert jnp.allclose(out, ref_small, atol=1e-5, rtol=1e-5), "mismatch (f32 small)"

    # 2) Larger input with a ragged last tile and an explicit user tile
    #    (exercises multi-step grid + masked writeback + sublane rounding).
    x_big = jax.random.normal(kx2, (4, 1000, in_features), jnp.float32)
    ref_big = ref_fn(x_big, weight_t)
    out_big = ingestables_simple_numeric_aligner(x_big, weight_t, tile_m=520)
    out_big = jax.block_until_ready(out_big)
    assert out_big.shape == (4, 1000, out_features), out_big.shape
    assert jnp.allclose(out_big, ref_big, atol=1e-5, rtol=1e-5), "mismatch (multi-tile)"

    # 3) Auto-tile path (>= 2 grid steps for megacore) with a bf16 output —
    #    the big bandwidth lever; accumulation stays f32.
    out_bf16 = ingestables_simple_numeric_aligner(
        x_big, weight_t, out_dtype=jnp.bfloat16
    )
    out_bf16 = jax.block_until_ready(out_bf16)
    assert out_bf16.dtype == jnp.bfloat16
    assert jnp.allclose(
        out_bf16.astype(jnp.float32), ref_big, atol=1e-2, rtol=1e-2
    ), "mismatch (bf16 output)"

    # 4) Default dispatch on tiny M uses the fused-XLA bypass (same semantics).
    out_fb = ingestables_simple_numeric_aligner(x_small, weight_t)
    out_fb = jax.block_until_ready(out_fb)
    assert jnp.allclose(out_fb, ref_small, atol=1e-5, rtol=1e-5), "mismatch (bypass)"

    print("KERNEL_OK")
</pallas_src>

<mosaic_0001>
module attributes {stable_mosaic.version = 11 : i64} {
  func.func @_aligner_kernel(%arg0: i32, %arg1: memref<16x32xf32, #tpu.memory_space<vmem>>, %arg2: memref<32x128xf32, #tpu.memory_space<vmem>>, %arg3: memref<16x128xf32, #tpu.memory_space<vmem>>) attributes {dimension_semantics = [#tpu.dimension_semantics<parallel>], iteration_bounds = array<i64: 1>, scalar_prefetch = 0 : i64, scratch_operands = 0 : i64, tpu.core_type = #tpu.core_type<tc>, window_params = [{transform_indices = @transform_0, window_bounds = array<i64: 16, 32>}, {pipeline_mode = #tpu.pipeline_mode<synchronous>, transform_indices = @transform_1, window_bounds = array<i64: 32, 128>}, {transform_indices = @transform_2, window_bounds = array<i64: 16, 128>}]} {
    %c0 = arith.constant 0 : index
    %c0_0 = arith.constant 0 : index
    %0 = vector.load %arg1[%c0, %c0_0] : memref<16x32xf32, #tpu.memory_space<vmem>>, vector<16x32xf32>
    %c0_1 = arith.constant 0 : index
    %c0_2 = arith.constant 0 : index
    %1 = vector.load %arg2[%c0_1, %c0_2] : memref<32x128xf32, #tpu.memory_space<vmem>>, vector<32x128xf32>
    %cst = arith.constant dense<0.000000e+00> : vector<16x128xf32>
    %2 = tpu.matmul %0, %1, %cst {dimension_numbers = #tpu.dot_dimension_numbers<[1], [0], [0], [1], [0, 0, 1, 1], [], []>} : vector<16x32xf32>, vector<32x128xf32>, vector<16x128xf32> -> vector<16x128xf32>
    %cst_3 = arith.constant 0.000000e+00 : f32
    %3 = vector.broadcast %cst_3 : f32 to vector<16x128xf32>
    %4 = arith.maximumf %2, %3 : vector<16x128xf32>
    %c0_4 = arith.constant 0 : index
    %c0_5 = arith.constant 0 : index
    %5 = vector.load %arg3[%c0_4, %c0_5] : memref<16x128xf32, #tpu.memory_space<vmem>>, vector<16x128xf32>
    tpu.vector_store %arg3[%c0_4, %c0_5], %4 {strides = array<i32>} : memref<16x128xf32, #tpu.memory_space<vmem>>, vector<16x128xf32>,
    return
  }
  func.func @transform_0(%arg0: i32) -> (i32, i32) {
    %c0_i32 = arith.constant 0 : i32
    %c0_i32_0 = arith.constant 0 : i32
    return %arg0, %c0_i32 : i32, i32
  }
  func.func @transform_1(%arg0: i32) -> (i32, i32) {
    %c0_i32 = arith.constant 0 : i32
    %c0_i32_0 = arith.constant 0 : i32
    %c0_i32_1 = arith.constant 0 : i32
    return %c0_i32, %c0_i32_0 : i32, i32
  }
  func.func @transform_2(%arg0: i32) -> (i32, i32) {
    %c0_i32 = arith.constant 0 : i32
    %c0_i32_0 = arith.constant 0 : i32
    return %arg0, %c0_i32 : i32, i32
  }
}

</mosaic_0001>

<llo_original>
// kernel: ingestables_simple_numeric_aligner.1
$region0: #{ingestables_simple_numeric_aligner.1}
  #allocation0 [shape = 'u32[]', space=smem, size = 0x4, offset = 0x4, fixed_abs, tag = 'smem constant byte address 0x4 - core index']
  #allocation1 [shape = 'u32[144,128]{1,0:T(1,128)}', space=vmem, size = 0x12000, scoped, tag = 'internal scratch']
  %s0 = inlined_call_operand.hbm [shape: f32[16,32], index: 0, kind: input, shape index: {}]
  %s1 = inlined_call_operand.hbm [shape: f32[32,128], index: 1, kind: input, shape index: {}]
  %s2 = inlined_call_operand.hbm [shape: f32[16,128], index: 2, kind: output, shape index: {}]
  %s3 = sld [smem:[#allocation0]]
  $region26: #{ingestables_simple_numeric_aligner.1} parent=0
    _
  %s5 = ssub.s32 1, %s3
  %s6 = scalar_select 0, %s5, %s3
  $region1: #{ingestables_simple_numeric_aligner.1} parent=0
    #allocation2 [shape = 'u8[8192]{0}', space=vmem, size = 0x2000, scoped, tag = 'input window, operand 0, single buffered']
    #allocation3 [shape = 's32[1]{0}', space=sflag, size = 0x4, scoped, tag = 'scoped memory for ingestables_simple_numeric_aligner.1']
    #allocation4 [shape = 's32[1]{0}', space=sflag, size = 0x4, scoped, tag = 'scoped memory for ingestables_simple_numeric_aligner.1']
    #allocation5 [shape = 'u8[16384]{0}', space=vmem, size = 0x4000, scoped, tag = 'input window, operand 1, single buffered']
    #allocation6 [shape = 's32[1]{0}', space=sflag, size = 0x4, scoped, tag = 'scoped memory for ingestables_simple_numeric_aligner.1']
    #allocation7 [shape = 'u8[8192]{0}', space=vmem, size = 0x2000, scoped, tag = 'output window, operand 0, single buffered']
    %7 = vsyncpa [#allocation3], 0
    %8 = vsyncpa [#allocation6], 0
    %9 = vsyncpa [#allocation4], 0
    // Predicated region
    $region2: #{ingestables_simple_numeric_aligner.1} parent=1 // pred_check
      _
    $region3: #{ingestables_simple_numeric_aligner.1} parent=1 // pred_check_branch
      %11 = sbr.rel (0) target = $region5
    $region4: #{ingestables_simple_numeric_aligner.1} parent=1 // pred_region
      %s13 = ssub.s32 256, 256
      %14 = vsyncadd [#allocation3], %s13
      %s15 = sshll.u32 [#allocation2], 4
      %s16 = int_to_ptr.vmem [resolvable:$true] %s15
      %21 = dma.hbm_to_vmem [thread:$0]  %s0, 256, %s16, [#allocation3], 128, 128, 8
    $region5: #{ingestables_simple_numeric_aligner.1} parent=1 // pred_fallthru
      _
    // Predicated region
    $region6: #{ingestables_simple_numeric_aligner.1} parent=1 // pred_check
      _
    $region7: #{ingestables_simple_numeric_aligner.1} parent=1 // pred_check_branch
      %23 = sbr.rel (0) target = $region9
    $region8: #{ingestables_simple_numeric_aligner.1} parent=1 // pred_region
      %s25 = ssub.s32 512, 512
      %26 = vsyncadd [#allocation6], %s25
      %s27 = sshll.u32 [#allocation5], 4
      %s28 = int_to_ptr.vmem [resolvable:$true] %s27
      %33 = dma.hbm_to_vmem [thread:$0]  %s1, 512, %s28, [#allocation6], 128, 128, 8
    $region9: #{ingestables_simple_numeric_aligner.1} parent=1 // pred_fallthru
      _
    // Predicated region
    $region10: #{ingestables_simple_numeric_aligner.1} parent=1 // pred_check
      _
    $region11: #{ingestables_simple_numeric_aligner.1} parent=1 // pred_check_branch
      %35 = sbr.rel (0) target = $region13
    $region12: #{ingestables_simple_numeric_aligner.1} parent=1 // pred_region
      %36 = dma.done [#allocation3], 256
    $region13: #{ingestables_simple_numeric_aligner.1} parent=1 // pred_fallthru
      _
    // Predicated region
    $region14: #{ingestables_simple_numeric_aligner.1} parent=1 // pred_check
      _
    $region15: #{ingestables_simple_numeric_aligner.1} parent=1 // pred_check_branch
      %38 = sbr.rel (0) target = $region17
    $region16: #{ingestables_simple_numeric_aligner.1} parent=1 // pred_region
      %39 = dma.done [#allocation6], 512
    $region17: #{ingestables_simple_numeric_aligner.1} parent=1 // pred_fallthru
      _
    %v40 = vld [vmem:[#allocation2] sm:$0xff]
    %v41 = vld [vmem:[#allocation2 + $0x8] sm:$0xff]
    %v42 = vld [vmem:[#allocation5] sm:$0xff]
    %v43 = vld [vmem:[#allocation5 + $0x8] sm:$0xff]
    %v44 = vld [vmem:[#allocation5 + $0x10] sm:$0xff]
    %v45 = vld [vmem:[#allocation5 + $0x18] sm:$0xff]
    %vm46 = vcmask 261120
    %v48 = vsel %vm46, %v40, 0
    %v51 = vsel %vm46, %v41, 0
    %53 = vmatprep.subr.mxu0 0.0
    %54 = vmatpush1.msra.mxu0 0.0
    %55 = vmatprep.subr.mxu0 0.0
    %56 = vmatpush1.msra.mxu0 0.0
    %57 = vmatprep.subr.mxu0 0.0
    %58 = vmatpush1.msra.mxu0 0.0
    %59 = vmatprep.subr.mxu0 0.0
    %60 = vmatpush1.msra.mxu0 0.0
    %61 = vmatprep.subr.mxu0 0.0
    %62 = vmatpush1.msra.mxu0 0.0
    %63 = vmatprep.subr.mxu0 0.0
    %64 = vmatpush1.msra.mxu0 0.0
    %65 = vmatprep.subr.mxu0 0.0
    %66 = vmatpush1.msra.mxu0 0.0
    %67 = vmatprep.subr.mxu0 0.0
    %68 = vmatpush1.msra.mxu0 0.0
    %69 = vmatprep.subr.mxu0 0.0
    %70 = vmatpush1.msra.mxu0 0.0
    %71 = vmatprep.subr.mxu0 0.0
    %72 = vmatpush1.msra.mxu0 0.0
    %73 = vmatprep.subr.mxu0 0.0
    %74 = vmatpush1.msra.mxu0 0.0
    %75 = vmatprep.subr.mxu0 0.0
    %76 = vmatpush1.msra.mxu0 0.0
    %77 = vmatprep.subr.mxu0 0.0
    %78 = vmatpush1.msra.mxu0 %v45
    %79 = vmatprep.subr.mxu0 0.0
    %80 = vmatpush1.msra.mxu0 %v44
    %81 = vmatprep.subr.mxu0 0.0
    %82 = vmatpush1.msra.mxu0 %v43
    %83 = vmatprep.subr.mxu0 0.0
    %84 = vmatpush1.msra.mxu0 %v42
    %85 = vmatprep.subr.mxu0 0.0
    %86 = vmatpush2.msra.mxu0 0.0
    %87 = vmatprep.subr.mxu0 0.0
    %88 = vmatpush2.msra.mxu0 0.0
    %89 = vmatprep.subr.mxu0 0.0
    %90 = vmatpush2.msra.mxu0 0.0
    %91 = vmatprep.subr.mxu0 0.0
    %92 = vmatpush2.msra.mxu0 0.0
    %93 = vmatprep.subr.mxu0 0.0
    %94 = vmatpush2.msra.mxu0 0.0
    %95 = vmatprep.subr.mxu0 0.0
    %96 = vmatpush2.msra.mxu0 0.0
    %97 = vmatprep.subr.mxu0 0.0
    %98 = vmatpush2.msra.mxu0 0.0
    %99 = vmatprep.subr.mxu0 0.0
    %100 = vmatpush2.msra.mxu0 0.0
    %101 = vmatprep.subr.mxu0 0.0
    %102 = vmatpush2.msra.mxu0 0.0
    %103 = vmatprep.subr.mxu0 0.0
    %104 = vmatpush2.msra.mxu0 0.0
    %105 = vmatprep.subr.mxu0 0.0
    %106 = vmatpush2.msra.mxu0 0.0
    %107 = vmatprep.subr.mxu0 0.0
    %108 = vmatpush2.msra.mxu0 0.0
    %109 = vmatprep.subr.mxu0 0.0
    %110 = vmatpush2.msra.mxu0 0.0
    %111 = vmatprep.subr.mxu0 0.0
    %112 = vmatpush2.msra.mxu0 0.0
    %113 = vmatprep.subr.mxu0 0.0
    %114 = vmatpush2.msra.mxu0 0.0
    %115 = vmatprep.subr.mxu0 0.0
    %116 = vmatpush2.msra.mxu0 0.0
    %117 = vmatprep.mubr.f32.mxu0 0.0
    %118 = vmatmul.mubr.f32.gmra.mxu0 %v48
    %v119 = vpop.f32.mrf.mxu0
    %v120 = vadd.f32 0.0, %v119
    %v121 = vpop.f32.mrf.mxu0
    %122 = vmatprep.mubr.f32.mxu0 0.0
    %123 = vmatmul.mubr.f32.gmra.mxu0 %v51
    %v124 = vpop.f32.mrf.mxu0
    %v125 = vadd.f32 0.0, %v124
    %v126 = vpop.f32.mrf.mxu0
    %127 = vdwg.mxu0
    %v128 = vmax.f32 %v120, 0.0
    %v129 = vmax.f32 %v125, 0.0
    %130 = vst [vmem:[#allocation7] sm:$0xff] %v128
    %131 = vst [vmem:[#allocation7 + $0x8] sm:$0xff] %v129
    // Predicated region
    $region18: #{ingestables_simple_numeric_aligner.1} parent=1 // pred_check
      _
    $region19: #{ingestables_simple_numeric_aligner.1} parent=1 // pred_check_branch
      %133 = sbr.rel (0) target = $region21
    $region20: #{ingestables_simple_numeric_aligner.1} parent=1 // pred_region
      %s135 = ssub.s32 256, 256
      %136 = vsyncadd [#allocation4], %s135
      %s137 = sshll.u32 [#allocation7], 4
      %s138 = int_to_ptr.vmem [resolvable:$true] %s137
      %143 = dma.vmem_to_hbm [thread:$0]  %s138, 256, %s2, [#allocation4], 128, 128, 8
    $region21: #{ingestables_simple_numeric_aligner.1} parent=1 // pred_fallthru
      _
    // Predicated region
    $region22: #{ingestables_simple_numeric_aligner.1} parent=1 // pred_check
      _
    $region23: #{ingestables_simple_numeric_aligner.1} parent=1 // pred_check_branch
      %145 = sbr.rel (0) target = $region25
    $region24: #{ingestables_simple_numeric_aligner.1} parent=1 // pred_region
      %146 = dma.done [#allocation4], 256
    $region25: #{ingestables_simple_numeric_aligner.1} parent=1 // pred_fallthru
      _
    %147 = vsyncpa [#allocation3], 1
    %148 = vsyncpa [#allocation6], 1
    %149 = vsyncpa [#allocation4], 1

</llo_original>
